<compile_context>
chip_gen: v7x
topology: tpu7x:2x2x1
jax: 0.10.0
libtpu: 0.0.40
codegen_flags: <defaults>
</compile_context>

<pallas_src>
import functools

import jax
import jax.numpy as jnp
from jax.experimental import pallas as pl
from jax.experimental.pallas import tpu as pltpu


def _gem_kernel(ps_ref, x_ref, o_ref, acc_ref, *,
                eps, hw, hw_tile, inv_hw, square_fast_path):
    # ps_ref : (C, 1)        per-channel exponent (resident, DMA'd once)
    # x_ref  : (1, C, HW_t)  one batch element, one spatial tile (NCHW-native)
    # o_ref  : (1, C, 1)     pooled output for this batch element
    # acc_ref: (C, 1) f32    running spatial sum (VMEM scratch)
    k = pl.program_id(1)
    last = pl.num_programs(1) - 1

    @pl.when(k == 0)
    def _():
        acc_ref[...] = jnp.zeros_like(acc_ref)

    x = x_ref[0].astype(jnp.float32)            # (C, HW_t)
    x = jnp.maximum(x, eps)                     # clamp(min=eps)

    if square_fast_path:                        # uniform p == 2: no EUP work
        hid = x * x
    else:                                       # exp(ps * log(x)) on the EUP
        hid = jnp.exp(ps_ref[...] * jnp.log(x))

    if hw % hw_tile != 0:
        # Only the final tile reaches past HW: full tiles accumulate
        # unmasked; the remainder tile masks its out-of-bounds lanes.
        @pl.when(k != last)
        def _():
            acc_ref[...] += jnp.sum(hid, axis=1, keepdims=True)

        @pl.when(k == last)
        def _():
            col = jax.lax.broadcasted_iota(jnp.int32, hid.shape, dimension=1)
            masked = jnp.where(k * hw_tile + col < hw, hid, 0.0)
            acc_ref[...] += jnp.sum(masked, axis=1, keepdims=True)
    else:
        # Lane reduction (XLU) -> (C, 1), accumulate.
        acc_ref[...] += jnp.sum(hid, axis=1, keepdims=True)

    @pl.when(k == last)
    def _():
        pooled = acc_ref[...] * inv_hw          # mean via hoisted 1/HW multiply
        if square_fast_path:
            out = jnp.sqrt(pooled)
        else:
            out = jnp.exp((1.0 / ps_ref[...]) * jnp.log(pooled))
        o_ref[0, :, :] = out.astype(o_ref.dtype)


def _choose_hw_tile(hw, c):
    """Lane-aligned spatial tile that keeps (2 input buffers + the f32
    intermediate) well under the v7x 32 MiB default scoped-VMEM budget."""
    budget_elems = (24 * 1024 * 1024) // (4 * 3 * max(c, 1))
    max_tile = max(128, min(2048, (budget_elems // 128) * 128))
    if hw <= max_tile:
        return hw                               # single step, full-extent block
    for t in range(max_tile, 127, -128):        # prefer an exact divisor
        if hw % t == 0:
            return t
    return max_tile                             # remainder tile handled by mask


def channel_wise_gem(x, ps, *, eps=1e-6, p_uniform=None):
    """x: (n, C, H, W) NCHW; ps: (C,).  Returns (n, C).

    p_uniform=2.0 selects the x*x / sqrt fast path (caller guarantees ps == 2
    everywhere, as in the module's default init)."""
    n, C, H, W = x.shape
    HW = H * W

    x_flat = x.reshape(n, C, HW)                # free reshape, no transpose
    ps_col = ps.reshape(C, 1).astype(jnp.float32)

    hw_tile = _choose_hw_tile(HW, C)
    num_k = pl.cdiv(HW, hw_tile)
    square_fast_path = (p_uniform is not None) and float(p_uniform) == 2.0

    kernel = functools.partial(
        _gem_kernel,
        eps=float(eps), hw=HW, hw_tile=hw_tile,
        inv_hw=1.0 / HW, square_fast_path=square_fast_path)

    cost = pl.CostEstimate(
        flops=3 * n * C * HW,
        transcendentals=(0 if square_fast_path else 2 * n * C * HW) + 2 * n * C,
        bytes_accessed=n * C * HW * x.dtype.itemsize + n * C * 4 + C * 4)

    out = pl.pallas_call(
        kernel,
        out_shape=jax.ShapeDtypeStruct((n, C, 1), jnp.float32),
        grid_spec=pltpu.PrefetchScalarGridSpec(
            num_scalar_prefetch=0,
            grid=(n, num_k),                    # reduction axis last
            in_specs=[
                pl.BlockSpec((C, 1), lambda i, k: (0, 0)),          # ps (resident)
                pl.BlockSpec((1, C, hw_tile), lambda i, k: (i, 0, k)),
            ],
            out_specs=pl.BlockSpec((1, C, 1), lambda i, k: (i, 0, 0)),
            scratch_shapes=[pltpu.VMEM((C, 1), jnp.float32)],
        ),
        compiler_params=pltpu.CompilerParams(
            dimension_semantics=("parallel", "arbitrary")),
        cost_estimate=cost,
    )(ps_col, x_flat)

    return out.reshape(n, C).astype(x.dtype)


def channel_wise_gem_ref(x, ps, *, eps=1e-6):
    """Pure-JAX reference mirroring the PyTorch forward exactly."""
    n, C, H, W = x.shape
    batch_input = jnp.transpose(x, (0, 3, 2, 1)).reshape(n * H * W, C)
    hid = jnp.power(jnp.maximum(batch_input, eps), ps)   # clamp(min=eps) ** ps
    pooled = hid.reshape(n, H * W, C).mean(axis=1)
    return jnp.power(pooled, 1.0 / ps)


if __name__ == "__main__":
    key = jax.random.PRNGKey(0)

    # Small shapes consistent with the module: batch=2, channels=4, spatial=16.
    n, C, H, W = 2, 4, 16, 16
    x = jax.random.normal(key, (n, C, H, W), dtype=jnp.float32)
    eps = 1e-6

    # Default module init (ps = ones(dim) * 2)  ->  x*x / sqrt fast path.
    ps_uniform = jnp.ones((C,), dtype=jnp.float32) * 2.0
    out = jax.block_until_ready(
        channel_wise_gem(x, ps_uniform, eps=eps, p_uniform=2.0))
    ref = channel_wise_gem_ref(x, ps_uniform, eps=eps)
    assert out.shape == (n, C), out.shape
    assert jnp.allclose(out, ref, atol=1e-5, rtol=1e-4), (out, ref)

    # General per-channel exponent path (exp/log on the EUP).
    ps_var = jnp.linspace(1.5, 3.0, C, dtype=jnp.float32)
    out2 = jax.block_until_ready(channel_wise_gem(x, ps_var, eps=eps))
    ref2 = channel_wise_gem_ref(x, ps_var, eps=eps)
    assert jnp.allclose(out2, ref2, atol=1e-5, rtol=1e-4), (out2, ref2)

    # Multi-step spatial reduction with a remainder tile (accumulator + mask).
    x3 = jax.random.normal(jax.random.PRNGKey(1), (n, C, 50, 50),
                           dtype=jnp.float32)
    out3 = jax.block_until_ready(channel_wise_gem(x3, ps_var, eps=eps))
    ref3 = channel_wise_gem_ref(x3, ps_var, eps=eps)
    assert jnp.allclose(out3, ref3, atol=1e-5, rtol=1e-4), (out3, ref3)

    print("KERNEL_OK")
</pallas_src>

<mosaic_0001>
module attributes {stable_mosaic.version = 11 : i64} {
  func.func @_gem_kernel(%arg0: i32, %arg1: i32, %arg2: memref<4x1xf32, #tpu.memory_space<vmem>>, %arg3: memref<1x4x256xf32, #tpu.memory_space<vmem>>, %arg4: memref<1x4x1xf32, #tpu.memory_space<vmem>>, %arg5: memref<4x1xf32, #tpu.memory_space<vmem>>) attributes {dimension_semantics = [#tpu.dimension_semantics<parallel>, #tpu.dimension_semantics<arbitrary>], iteration_bounds = array<i64: 2, 1>, scalar_prefetch = 0 : i64, scratch_operands = 1 : i64, tpu.core_type = #tpu.core_type<tc>, window_params = [{pipeline_mode = #tpu.pipeline_mode<synchronous>, transform_indices = @transform_0, window_bounds = array<i64: 4, 1>}, {transform_indices = @transform_1, window_bounds = array<i64: 1, 4, 256>}, {transform_indices = @transform_2, window_bounds = array<i64: 1, 4, 1>}]} {
    %c0_i32 = arith.constant 0 : i32
    %0 = arith.cmpi eq, %arg1, %c0_i32 : i32
    %1 = arith.extui %0 : i1 to i32
    %c0_i32_0 = arith.constant 0 : i32
    %2 = arith.cmpi ne, %1, %c0_i32_0 : i32
    scf.if %2 {
      %cst_10 = arith.constant 0.000000e+00 : f32
      %16 = vector.broadcast %cst_10 : f32 to vector<4x1xf32>
      %c0_11 = arith.constant 0 : index
      %c0_12 = arith.constant 0 : index
      %17 = vector.load %arg5[%c0_11, %c0_12] : memref<4x1xf32, #tpu.memory_space<vmem>>, vector<4x1xf32>
      tpu.vector_store %arg5[%c0_11, %c0_12], %16 {strides = array<i32>} : memref<4x1xf32, #tpu.memory_space<vmem>>, vector<4x1xf32>,
    } else {
    }
    %c0 = arith.constant 0 : index
    %c0_1 = arith.constant 0 : index
    %c0_2 = arith.constant 0 : index
    %3 = vector.load %arg3[%c0, %c0_1, %c0_2] : memref<1x4x256xf32, #tpu.memory_space<vmem>>, vector<1x4x256xf32>
    %4 = vector.shape_cast %3 : vector<1x4x256xf32> to vector<4x256xf32>
    %cst = arith.constant 9.99999997E-7 : f32
    %5 = vector.broadcast %cst : f32 to vector<4x256xf32>
    %6 = arith.maximumf %4, %5 : vector<4x256xf32>
    %7 = arith.mulf %6, %6 : vector<4x256xf32>
    %c0_3 = arith.constant 0 : index
    %c0_4 = arith.constant 0 : index
    %8 = vector.load %arg5[%c0_3, %c0_4] : memref<4x1xf32, #tpu.memory_space<vmem>>, vector<4x1xf32>
    %cst_5 = arith.constant dense<0.000000e+00> : vector<4xf32>
    %9 = vector.multi_reduction <add>, %7, %cst_5 [1] : vector<4x256xf32> to vector<4xf32>
    %10 = vector.shape_cast %9 : vector<4xf32> to vector<4x1xf32>
    %11 = arith.addf %8, %10 : vector<4x1xf32>
    %c0_6 = arith.constant 0 : index
    %c0_7 = arith.constant 0 : index
    %12 = vector.load %arg5[%c0_6, %c0_7] : memref<4x1xf32, #tpu.memory_space<vmem>>, vector<4x1xf32>
    tpu.vector_store %arg5[%c0_6, %c0_7], %11 {strides = array<i32>} : memref<4x1xf32, #tpu.memory_space<vmem>>, vector<4x1xf32>,
    %c0_i32_8 = arith.constant 0 : i32
    %13 = arith.cmpi eq, %arg1, %c0_i32_8 : i32
    %14 = arith.extui %13 : i1 to i32
    %c0_i32_9 = arith.constant 0 : i32
    %15 = arith.cmpi ne, %14, %c0_i32_9 : i32
    scf.if %15 {
      %c0_10 = arith.constant 0 : index
      %c0_11 = arith.constant 0 : index
      %16 = vector.load %arg5[%c0_10, %c0_11] : memref<4x1xf32, #tpu.memory_space<vmem>>, vector<4x1xf32>
      %cst_12 = arith.constant 3.906250e-03 : f32
      %17 = vector.broadcast %cst_12 : f32 to vector<4x1xf32>
      %18 = arith.mulf %16, %17 : vector<4x1xf32>
      %19 = math.sqrt %18 : vector<4x1xf32>
      %c0_13 = arith.constant 0 : index
      %c0_14 = arith.constant 0 : index
      %c0_15 = arith.constant 0 : index
      %20 = vector.load %arg4[%c0_13, %c0_14, %c0_15] : memref<1x4x1xf32, #tpu.memory_space<vmem>>, vector<1x4x1xf32>
      %21 = vector.shape_cast %20 : vector<1x4x1xf32> to vector<4x1xf32>
      %22 = vector.shape_cast %19 : vector<4x1xf32> to vector<1x4x1xf32>
      tpu.vector_store %arg4[%c0_13, %c0_14, %c0_15], %22 {strides = array<i32>} : memref<1x4x1xf32, #tpu.memory_space<vmem>>, vector<1x4x1xf32>,
    } else {
    }
    return
  }
  func.func @transform_0(%arg0: i32, %arg1: i32) -> (i32, i32) {
    %c0_i32 = arith.constant 0 : i32
    %c0_i32_0 = arith.constant 0 : i32
    %c0_i32_1 = arith.constant 0 : i32
    return %c0_i32, %c0_i32_0 : i32, i32
  }
  func.func @transform_1(%arg0: i32, %arg1: i32) -> (i32, i32, i32) {
    %c0_i32 = arith.constant 0 : i32
    %c0_i32_0 = arith.constant 0 : i32
    return %arg0, %c0_i32, %arg1 : i32, i32, i32
  }
  func.func @transform_2(%arg0: i32, %arg1: i32) -> (i32, i32, i32) {
    %c0_i32 = arith.constant 0 : i32
    %c0_i32_0 = arith.constant 0 : i32
    %c0_i32_1 = arith.constant 0 : i32
    return %arg0, %c0_i32, %c0_i32_0 : i32, i32, i32
  }
}

</mosaic_0001>

<llo_original>
// kernel: tpu_custom_call.1
$region0: #{tpu_custom_call.1}
  #allocation0 [shape = 'u32[]', space=smem, size = 0x4, offset = 0x4, fixed_abs, tag = 'smem constant byte address 0x4 - core index']
  #allocation1 [shape = 'u32[144,128]{1,0:T(1,128)}', space=vmem, size = 0x12000, scoped, tag = 'internal scratch']
  #allocation2 [shape = 'f32[4,1]{1,0:T(4,128)}', space=vmem, size = 0x800, scoped, tag = 'scratch operand']
  %s0 = inlined_call_operand.vmem [shape: f32[4,1], index: 0, kind: input, shape index: {}]
  %s1 = inlined_call_operand.hbm [shape: f32[2,4,256], index: 1, kind: input, shape index: {}]
  %s2 = inlined_call_operand.vmem [shape: f32[2,4,1], index: 2, kind: output, shape index: {}]
  %s3 = sld [smem:[#allocation0]]
  $region53: #{tpu_custom_call.1} parent=0
    _
  %s5 = ssub.s32 1, %s3
  %s6 = scalar_select 0, %s5, %s3
  $region1: #{tpu_custom_call.1} parent=0
    #allocation3 [shape = 'u8[8192]{0}', space=vmem, size = 0x2000, scoped, tag = 'input window, operand 1']
    #allocation4 [shape = 's32[2]{0}', space=sflag, size = 0x8, scoped, tag = 'scoped memory for tpu_custom_call.1']
    %7 = vsyncpa [#allocation4], 0
    %s8 = scalar_lea.sflag [#allocation4], 1
    %9 = vsyncpa %s8, 0
    loop: start=0, step=1, limit=4
    $region2: #{tpu_custom_call.1} parent=1 // loop_pre_header
      _
    $region3: #{tpu_custom_call.1} parent=1 // loop_header
      %s11 = sphi 0, %s15
      %p12 = scmp.ge.s32.totalorder %s11, 4
      %s18 = sphi 0, %s30
      %s19 = sphi 0, %s26
      %s20 = sphi 0, %s18
      %s21 = sphi 0, %s19
      %s22 = sphi 0, %s20
      %s23 = sphi 0, %s21
      %s31 = sphi 0, %s31
      %s33 = sphi 0, %s31
      %s34 = sphi 0, %s33
      %s48 = sphi 0, %s34
      %s56 = sphi 0, %s58
      %s59 = sphi 0, %s56
      %s60 = sphi 0, %s59
      %s76 = sphi 0, %s60
      %s82 = sphi 0, %s84
      %s85 = sphi 0, %s82
      %s86 = sphi 0, %s85
      %s102 = sphi 0, %s86
    $region4: #{tpu_custom_call.1} parent=1 // loop_header_branch
      %14 = sbr.rel (%p12) target = $region8
    $region5: #{tpu_custom_call.1} parent=1 // loop_body
      %s16 = ssub.s32 %s11, 1
      %s17 = ssub.s32 %s11, 2
      %s24 = sadd.s32 1, %s19
      %p25 = scmp.ge.s32.totalorder %s24, 1
      %s26 = scalar_select %p25, 0, %s24
      %s27 = sadd.s32 1, %s18
      %s28 = scalar_select %p25, %s27, %s18
      %p29 = scmp.ge.s32.totalorder %s28, 2
      %s30 = scalar_select %p29, 0, %s28
      %s32 = sadd.s32 %s31, 1
      %p35 = scmp.eq.s32.totalorder %s11, 1
      %p36 = scmp.ne.s32.totalorder %s31, %s33
      %p37 = scmp.eq.s32.totalorder %s11, 0
      %p38 = por %p36, %p37
      %p39 = scmp.ne.s32.totalorder %s31, %s33
      %p40 = scmp.eq.s32.totalorder %s16, 1
      %p41 = por %p39, %p40
      %p42 = scmp.ne.s32.totalorder %s33, %s34
      %p43 = scmp.eq.s32.totalorder %s16, 0
      %p44 = por %p42, %p43
      %p45 = scmp.ne.s32.totalorder %s33, %s34
      %p46 = scmp.eq.s32.totalorder %s17, 1
      %p47 = por %p45, %p46
      %p49 = scmp.ne.s32.totalorder %s34, %s48
      %p50 = scmp.eq.s32.totalorder %s17, 0
      %p51 = por %p49, %p50
      %s52 = ssub.s32 %s18, %s30
      %s53 = ssub.s32 %s19, %s26
      %s54 = sor.u32 %s52, %s53
      %p55 = scmp.eq.s32.totalorder %s54, 0
      %s57 = sadd.s32 %s56, 1
      %s58 = scalar_select %p55, %s56, %s57
      %p61 = pneg %p55
      %p62 = scmp.eq.s32.totalorder %s11, 1
      %p63 = por %p61, %p62
      %p64 = scmp.ne.s32.totalorder %s56, %s59
      %p65 = scmp.eq.s32.totalorder %s11, 0
      %p66 = por %p64, %p65
      %p67 = scmp.ne.s32.totalorder %s56, %s59
      %p68 = scmp.eq.s32.totalorder %s16, 1
      %p69 = por %p67, %p68
      %p70 = scmp.ne.s32.totalorder %s59, %s60
      %p71 = scmp.eq.s32.totalorder %s16, 0
      %p72 = por %p70, %p71
      %p73 = scmp.ne.s32.totalorder %s59, %s60
      %p74 = scmp.eq.s32.totalorder %s17, 1
      %p75 = por %p73, %p74
      %p77 = scmp.ne.s32.totalorder %s60, %s76
      %p78 = scmp.eq.s32.totalorder %s17, 0
      %p79 = por %p77, %p78
      %s80 = ssub.s32 %s18, %s30
      %p81 = scmp.eq.s32.totalorder %s80, 0
      %s83 = sadd.s32 %s82, 1
      %s84 = scalar_select %p81, %s82, %s83
      %p87 = pneg %p81
      %p88 = scmp.eq.s32.totalorder %s11, 1
      %p89 = por %p87, %p88
      %p90 = scmp.ne.s32.totalorder %s82, %s85
      %p91 = scmp.eq.s32.totalorder %s11, 0
      %p92 = por %p90, %p91
      %p93 = scmp.ne.s32.totalorder %s82, %s85
      %p94 = scmp.eq.s32.totalorder %s16, 1
      %p95 = por %p93, %p94
      %p96 = scmp.ne.s32.totalorder %s85, %s86
      %p97 = scmp.eq.s32.totalorder %s16, 0
      %p98 = por %p96, %p97
      %p99 = scmp.ne.s32.totalorder %s85, %s86
      %p100 = scmp.eq.s32.totalorder %s17, 1
      %p101 = por %p99, %p100
      %p103 = scmp.ne.s32.totalorder %s86, %s102
      %p104 = scmp.eq.s32.totalorder %s17, 0
      %p105 = por %p103, %p104
      %p106 = scmp.le.s32.totalorder 1, %s11
      %p107 = scmp.lt.s32.totalorder %s11, 3
      %p108 = pnand %p106, %p107
      %p109 = pneg %p108
      // Predicated region
      $region9: #{tpu_custom_call.1} parent=5 // pred_check
        _
      $region10: #{tpu_custom_call.1} parent=5 // pred_check_branch
        %111 = sbr.rel (%p108) target = $region12
      $region11: #{tpu_custom_call.1} parent=5 // pred_region
        %s112 = ssub.s32 %s11, 1
        // Predicated region
        $region13: #{tpu_custom_call.1} parent=11 // pred_check
          %p113 = pneg %p44
        $region14: #{tpu_custom_call.1} parent=11 // pred_check_branch
          %115 = sbr.rel (%p113) target = $region16
        $region15: #{tpu_custom_call.1} parent=11 // pred_region
          _
        $region16: #{tpu_custom_call.1} parent=11 // pred_fallthru
          _
      $region12: #{tpu_custom_call.1} parent=5 // pred_fallthru
        _
      %p116 = scmp.lt.s32.totalorder %s11, 2
      // Predicated region
      $region17: #{tpu_custom_call.1} parent=5 // pred_check
        %p117 = pneg %p116
      $region18: #{tpu_custom_call.1} parent=5 // pred_check_branch
        %119 = sbr.rel (%p117) target = $region20
      $region19: #{tpu_custom_call.1} parent=5 // pred_region
        // Predicated region
        $region21: #{tpu_custom_call.1} parent=19 // pred_check
          %p120 = pneg %p66
        $region22: #{tpu_custom_call.1} parent=19 // pred_check_branch
          %122 = sbr.rel (%p120) target = $region24
        $region23: #{tpu_custom_call.1} parent=19 // pred_region
          %s123 = sand.u32 %s56, 1
          %s124 = scalar_lea.sflag [#allocation4], %s123
          %s125 = sand.u32 %s56, 1
          %s126 = smul.addr %s125, 8
          %s127 = scalar_lea.vmem [#allocation3], %s126
          %s128 = smul.u32 2, %s19
          %s130 = ssub.s32 128, 128
          %131 = vsyncadd %s124, %s130
          %s132 = smul.addr %s18, 2
          %s133 = sadd.s32 %s128, %s132
          %s134 = smul.addr %s133, 64
          %s135 = scalar_lea.hbm %s1, %s134
          %s137 = sshll.u32 %s127, 4
          %s138 = int_to_ptr.vmem [resolvable:$true] %s137
          %140 = dma.hbm_to_vmem [thread:$0]  %s135, 128, %s138, %s124
        $region24: #{tpu_custom_call.1} parent=19 // pred_fallthru
          _
      $region20: #{tpu_custom_call.1} parent=5 // pred_fallthru
        _
      %p141 = scmp.le.s32.totalorder 1, %s11
      %p142 = scmp.lt.s32.totalorder %s11, 3
      %p143 = pnand %p141, %p142
      %p144 = pneg %p143
      // Predicated region
      $region25: #{tpu_custom_call.1} parent=5 // pred_check
        _
      $region26: #{tpu_custom_call.1} parent=5 // pred_check_branch
        %146 = sbr.rel (%p143) target = $region28
      $region27: #{tpu_custom_call.1} parent=5 // pred_region
        %s147 = ssub.s32 %s11, 1
        %s148 = sand.u32 %s59, 1
        %s149 = scalar_lea.sflag [#allocation4], %s148
        %s150 = sand.u32 %s59, 1
        %s151 = smul.addr %s150, 8
        %s152 = scalar_lea.vmem [#allocation3], %s151
        // Predicated region
        $region29: #{tpu_custom_call.1} parent=27 // pred_check
          %p153 = pneg %p72
        $region30: #{tpu_custom_call.1} parent=27 // pred_check_branch
          %155 = sbr.rel (%p153) target = $region32
        $region31: #{tpu_custom_call.1} parent=27 // pred_region
          %156 = dma.done %s149, 128
        $region32: #{tpu_custom_call.1} parent=27 // pred_fallthru
          _
        %p157 = pneg %p44
        %p158 = pneg %p41
        %s159 = sand.u32 %s59, 1
        %s160 = scalar_lea.sflag [#allocation4], %s159
        %s161 = sand.u32 %s59, 1
        %s162 = smul.addr %s161, 8
        %s163 = scalar_lea.vmem [#allocation3], %s162
        %p164 = pneg %p72
        %p165 = pneg %p69
        %p166 = pneg %p98
        %p167 = pneg %p95
        %p168 = scmp.lt.s32.totalorder %s20, 1
        %s169 = scalar_select %p168, %s20, 1
        %s170 = smul.addr %s169, 4
        %s171 = scalar_lea.vmem %s2, %s170
        %s172 = smul.u32 2, %s21
        %p173 = scmp.lt.s32.totalorder %s20, 1
        %s174 = scalar_select %p173, %s20, 1
        %s175 = smul.addr %s174, 4
        %s176 = scalar_lea.vmem %s2, %s175
        %p177 = scmp.eq.s32.totalorder %s21, 0
        // Predicated region
        $region33: #{tpu_custom_call.1} parent=27 // pred_check
          %p178 = pneg %p177
        $region34: #{tpu_custom_call.1} parent=27 // pred_check_branch
          %180 = sbr.rel (%p178) target = $region36
        $region35: #{tpu_custom_call.1} parent=27 // pred_region
          %vm181 = vcmask 3072
          %182 = vst.msk [vmem:[#allocation2] sm:$0xf] %vm181, 0.0
        $region36: #{tpu_custom_call.1} parent=27 // pred_fallthru
          _
        %v183 = vld [vmem:[%s152] sm:$0xff]
        %v184 = vmax.f32 %v183, 1e-06
        %v185 = vmul.f32 %v184, %v184
        %v186 = vld [vmem:[#allocation2] sm:$0xf]
        %v188 = vcombine.high %v185, %v185
        %vm190 = vcmask 1043456
        %v191 = vsel %vm190, %v185, 0.0
        %v192 = vsel %vm190, %v188, 0.0
        %v193 = vadd.f32 %v191, %v192
        %194 = vadd.xlane.f32.xlu0 %v193
        %v195 = vpop.xlane.xlu0 %194
        %v196 = vadd.f32 %v186, %v195
        %vm197 = vcmask 3072
        %198 = vst.msk [vmem:[#allocation2] sm:$0xf] %vm197, %v196
        // Predicated region
        $region37: #{tpu_custom_call.1} parent=27 // pred_check
          %p199 = pneg %p177
        $region38: #{tpu_custom_call.1} parent=27 // pred_check_branch
          %201 = sbr.rel (%p199) target = $region40
        $region39: #{tpu_custom_call.1} parent=27 // pred_region
          %v202 = vld [vmem:[#allocation2] sm:$0xf]
          %v203 = vmul.f32 %v202, 0.00390625
          %v204 = vrsqrt.pop %v203
          %v205 = vmul.f32 %v203, %v204
          %vm206 = vcmp.eq.f32.partialorder %v203, inf
          %v207 = vsel %vm206, %v203, %v205
          %vm208 = vcmp.eq.f32.partialorder %v203, 0.0
          %v209 = vand.u32 %v203, 2147483648
          %v210 = vsel %vm208, %v209, %v207
          %211 = vst.msk [vmem:[%s176] sm:$0xf] %vm197, %v210
        $region40: #{tpu_custom_call.1} parent=27 // pred_fallthru
          _
        %p212 = scmp.lt.s32.totalorder %s20, 1
        %s213 = scalar_select %p212, %s20, 1
        %s214 = smul.addr %s213, 4
        %s215 = scalar_lea.vmem %s2, %s214
        // Predicated region
        $region41: #{tpu_custom_call.1} parent=27 // pred_check
          %p216 = pneg %p95
        $region42: #{tpu_custom_call.1} parent=27 // pred_check_branch
          %218 = sbr.rel (%p216) target = $region44
        $region43: #{tpu_custom_call.1} parent=27 // pred_region
          _
        $region44: #{tpu_custom_call.1} parent=27 // pred_fallthru
          _
      $region28: #{tpu_custom_call.1} parent=5 // pred_fallthru
        _
      %p219 = scmp.le.s32.totalorder 2, %s11
      // Predicated region
      $region45: #{tpu_custom_call.1} parent=5 // pred_check
        %p220 = pneg %p219
      $region46: #{tpu_custom_call.1} parent=5 // pred_check_branch
        %222 = sbr.rel (%p220) target = $region48
      $region47: #{tpu_custom_call.1} parent=5 // pred_region
        %s223 = ssub.s32 %s11, 2
        // Predicated region
        $region49: #{tpu_custom_call.1} parent=47 // pred_check
          %p224 = pneg %p101
        $region50: #{tpu_custom_call.1} parent=47 // pred_check_branch
          %226 = sbr.rel (%p224) target = $region52
        $region51: #{tpu_custom_call.1} parent=47 // pred_region
          %p227 = scmp.lt.s32.totalorder %s22, 1
          %s228 = scalar_select %p227, %s22, 1
          %s229 = smul.addr %s228, 4
          %s230 = scalar_lea.vmem %s2, %s229
        $region52: #{tpu_custom_call.1} parent=47 // pred_fallthru
          _
      $region48: #{tpu_custom_call.1} parent=5 // pred_fallthru
        _
    $region6: #{tpu_custom_call.1} parent=1 // loop_footer
      %s15 = sadd.s32 1, %s11
    $region7: #{tpu_custom_call.1} parent=1 // loop_footer_branch
      %10 = sbr.rel target = $region3
    $region8: #{tpu_custom_call.1} parent=1 // loop_exit
      _
    %231 = vsyncpa [#allocation4], 1
    %s232 = scalar_lea.sflag [#allocation4], 1
    %233 = vsyncpa %s232, 1

</llo_original>
